<compile_context>
chip_gen: v7x
topology: tpu7x:2x2x1
jax: 0.10.0
libtpu: 0.0.40
codegen_flags: <defaults>
</compile_context>

<pallas_src>
import jax
import jax.numpy as jnp
from jax.experimental import pallas as pl
from jax.experimental.pallas import tpu as pltpu


_MAX_TILE_N = 256              # max tokens per grid step
_MIN_TILES = 8                 # aim for >= this many grid steps (v7x megacore)
_TILE_VMEM_BUDGET = 8 << 20    # budget for per-tile VMEM buffers (~3 live)
_VMEM_LIMIT_BYTES = 32 << 20   # safe on v5e/v6e (128 MiB) and v7x (64 MiB)
_VMEM_FAST_PATH_BYTES = 16 << 20  # tables at/below this use the XLA gather


def _round_up(x, m):
    return ((x + m - 1) // m) * m


def _gather_kernel(nt_ref, ids_ref, w_hbm, out_ref, *scratch):
    """Row-gather one token tile from the HBM-resident embedding table.

    nt_ref : SMEM (1,)     int32  — number of real (non-padded) tokens
    ids_ref: SMEM (n_pad,) int32  — flattened, clamped token ids
    w_hbm  : HBM  (num_embeddings, emb_dim) table (memory_space=pl.ANY)
    out_ref: VMEM (tile_n, emb_dim) output block
    scratch: (sem,) when out dtype == weight dtype (rows land directly in the
             output block), else (rows, sem) with a cast on the final store.
    """
    if len(scratch) == 2:
        rows, sem_arr = scratch          # dtype-cast path
    else:
        rows = None
        (sem_arr,) = scratch
    dst = out_ref if rows is None else rows
    sem = sem_arr.at[0]

    tile_n = out_ref.shape[0]
    base = pl.program_id(0) * tile_n
    n_tok = nt_ref[0]

    # Issue *every* row-gather DMA of this tile up front (no artificial
    # in-flight window).  All copies signal the same semaphore; nothing reads
    # `dst` until the matching number of waits below has completed, so a
    # single shared semaphore is race-free.
    @pl.loop(0, tile_n)
    def _(t):
        @pl.when(base + t < n_tok)       # skip gathers for padded tail tokens
        def _():
            row = ids_ref[base + t]
            pltpu.make_async_copy(
                w_hbm.at[pl.ds(row, 1)],     # (1, emb_dim) row in HBM
                dst.at[pl.ds(t, 1)],         # (1, emb_dim) slot in VMEM
                sem,
            ).start()

    # Drain: one wait per issued copy.  The wait only needs the copy's byte
    # count and semaphore, so use fixed slices (same shape) and avoid
    # re-reading ids from SMEM.
    @pl.loop(0, tile_n)
    def _(t):
        @pl.when(base + t < n_tok)
        def _():
            pltpu.make_async_copy(
                w_hbm.at[pl.ds(0, 1)],
                dst.at[pl.ds(0, 1)],
                sem,
            ).wait()

    if rows is not None:
        # Only needed for a genuine dtype cast; otherwise rows were DMA'd
        # straight into the pipelined output block (no VMEM->VMEM copy).
        out_ref[...] = rows[...].astype(out_ref.dtype)


def chunked_embedding(ids, weight, chunk_size=1000, out_dtype=None,
                      vmem_fast_path_bytes=_VMEM_FAST_PATH_BYTES):
    """Pallas equivalent of ChunkedEmbedding.forward.

    ids:    integer array, arbitrary shape, values in [0, num_embeddings)
    weight: (num_embeddings, embedding_dim) table (concatenation of the
            module's chunks — result is identical for any chunk_size).
    """
    del chunk_size  # storage detail; does not change forward semantics
    out_dtype = weight.dtype if out_dtype is None else jnp.dtype(out_dtype)
    num_embeddings, emb_dim = weight.shape

    in_shape = ids.shape
    ids_flat = ids.reshape(-1).astype(jnp.int32)
    n_tokens = int(ids_flat.shape[0])
    if n_tokens == 0:
        return jnp.zeros((*in_shape, emb_dim), dtype=out_dtype)

    # Clamp (jnp.take-style safety; prevents OOB DMAs).
    ids_flat = jnp.clip(ids_flat, 0, num_embeddings - 1)

    # Fast path: small/medium tables.  Per-row HBM DMAs are pure descriptor /
    # latency overhead there; an XLA gather is far cheaper.
    table_bytes = num_embeddings * emb_dim * jnp.dtype(weight.dtype).itemsize
    if table_bytes <= vmem_fast_path_bytes:
        out = jnp.take(weight, ids_flat, axis=0).astype(out_dtype)
        return out.reshape(*in_shape, emb_dim)

    # ---- Pallas HBM row-gather path (large tables) -------------------------
    w_isz = jnp.dtype(weight.dtype).itemsize
    o_isz = jnp.dtype(out_dtype).itemsize
    itemsize = max(w_isz, o_isz)
    # Sublane alignment: 8 for 32-bit, 16 for 16-bit, 32 for 8-bit dtypes.
    align = 8 * max(1, 4 // min(w_isz, o_isz))

    # ~3 tile-sized VMEM buffers live at once (double-buffered out block +
    # optional cast scratch); keep them inside the budget.
    cap = max(align, (_TILE_VMEM_BUDGET // (3 * emb_dim * itemsize)) // align * align)
    tile_n = min(_MAX_TILE_N, cap)
    # Keep >= _MIN_TILES grid steps when there are enough tokens so the
    # "parallel" grid axis can shard tiles across v7x's two TensorCores.
    tile_n = min(tile_n, max(align, _round_up(pl.cdiv(n_tokens, _MIN_TILES), align)))

    n_pad = _round_up(n_tokens, tile_n)
    ids_pad = jnp.zeros((n_pad,), jnp.int32).at[:n_tokens].set(ids_flat)
    n_tok_arr = jnp.array([n_tokens], jnp.int32)
    n_tiles = n_pad // tile_n

    needs_cast = jnp.dtype(out_dtype) != jnp.dtype(weight.dtype)
    scratch_shapes = []
    if needs_cast:
        scratch_shapes.append(pltpu.VMEM((tile_n, emb_dim), weight.dtype))
    scratch_shapes.append(pltpu.SemaphoreType.DMA((1,)))

    out = pl.pallas_call(
        _gather_kernel,
        out_shape=jax.ShapeDtypeStruct((n_pad, emb_dim), out_dtype),
        grid_spec=pltpu.PrefetchScalarGridSpec(
            num_scalar_prefetch=2,                      # n_tokens, ids -> SMEM
            grid=(n_tiles,),
            in_specs=[
                pl.BlockSpec(memory_space=pl.ANY),      # table stays in HBM
            ],
            out_specs=pl.BlockSpec((tile_n, emb_dim),
                                   lambda i, nt, ids: (i, 0)),
            scratch_shapes=scratch_shapes,
        ),
        compiler_params=pltpu.CompilerParams(
            dimension_semantics=("parallel",),
            vmem_limit_bytes=_VMEM_LIMIT_BYTES,
        ),
    )(n_tok_arr, ids_pad, weight)

    out = out[:n_tokens]
    return out.reshape(*in_shape, emb_dim)


if __name__ == "__main__":
    key = jax.random.PRNGKey(0)
    k_w, k_ids = jax.random.split(key)

    num_embeddings = 40
    embedding_dim = 32
    chunk_size = 16          # -> 3 chunks (last one partial), like the module

    weight = jax.random.normal(k_w, (num_embeddings, embedding_dim), jnp.float32)
    ids = jax.random.randint(k_ids, (2, 8), 0, num_embeddings, jnp.int32)

    ref = jnp.take(weight, ids, axis=0)  # plain embedding lookup reference

    # Force the Pallas HBM row-gather kernel (a 40x32 table would otherwise
    # take the small-table XLA fast path).
    out = chunked_embedding(ids, weight, chunk_size, vmem_fast_path_bytes=0)
    out = jax.block_until_ready(out)
    assert out.shape == (2, 8, embedding_dim)
    assert out.dtype == weight.dtype
    assert jnp.allclose(out, ref, atol=1e-6, rtol=1e-6)

    # Dtype-cast path of the kernel (rows land in scratch, cast on store).
    out_bf16 = chunked_embedding(ids, weight, chunk_size,
                                 out_dtype=jnp.bfloat16, vmem_fast_path_bytes=0)
    out_bf16 = jax.block_until_ready(out_bf16)
    assert out_bf16.dtype == jnp.bfloat16
    assert jnp.allclose(out_bf16.astype(jnp.float32),
                        ref.astype(jnp.bfloat16).astype(jnp.float32),
                        atol=1e-2, rtol=1e-2)

    # Default dispatch (small table -> fast path) must agree as well.
    out_fast = jax.block_until_ready(chunked_embedding(ids, weight, chunk_size))
    assert jnp.allclose(out_fast, ref, atol=1e-6, rtol=1e-6)

    print("KERNEL_OK")
</pallas_src>

<mosaic_0001>
module attributes {stable_mosaic.version = 11 : i64} {
  func.func @_gather_kernel(%arg0: i32, %arg1: memref<1xi32, #tpu.memory_space<smem>>, %arg2: memref<16xi32, #tpu.memory_space<smem>>, %arg3: memref<40x32xf32, #tpu.memory_space<any>>, %arg4: memref<8x32xf32, #tpu.memory_space<vmem>>, %arg5: memref<1x!tpu.dma_semaphore, #tpu.memory_space<semaphore_mem>>) attributes {dimension_semantics = [#tpu.dimension_semantics<parallel>], iteration_bounds = array<i64: 2>, scalar_prefetch = 2 : i64, scratch_operands = 1 : i64, tpu.core_type = #tpu.core_type<tc>, window_params = [{}, {transform_indices = @transform_1, window_bounds = array<i64: 8, 32>}]} {
    %c8_i32 = arith.constant 8 : i32
    %0 = arith.muli %arg0, %c8_i32 : i32
    %c0 = arith.constant 0 : index
    %1 = memref.load %arg1[%c0] : memref<1xi32, #tpu.memory_space<smem>>
    %c0_i32 = arith.constant 0 : i32
    %c0_i32_0 = arith.constant 0 : i32
    %c8_i32_1 = arith.constant 8 : i32
    %2 = arith.addi %c0_i32_0, %c8_i32_1 : i32
    %c1_i32 = arith.constant 1 : i32
    scf.for %arg6 = %c0_i32_0 to %2 step %c1_i32  : i32 {
      %c1_i32_8 = arith.constant 1 : i32
      %4 = arith.muli %arg6, %c1_i32_8 : i32
      %c0_i32_9 = arith.constant 0 : i32
      %5 = arith.addi %c0_i32_9, %4 : i32
      %6 = arith.addi %0, %5 : i32
      %7 = arith.cmpi slt, %6, %1 : i32
      %8 = arith.extui %7 : i1 to i32
      %c0_i32_10 = arith.constant 0 : i32
      %9 = arith.cmpi ne, %8, %c0_i32_10 : i32
      scf.if %9 {
        %10 = arith.addi %0, %5 : i32
        %11 = arith.index_cast %10 : i32 to index
        %12 = memref.load %arg2[%11] : memref<16xi32, #tpu.memory_space<smem>>
        %c0_i32_11 = arith.constant 0 : i32
        %13 = tpu.memref_slice %arg3[%12, %c0_i32_11] : memref<40x32xf32, #tpu.memory_space<any>> -> memref<1x32xf32, #tpu.memory_space<any>>
        %c0_i32_12 = arith.constant 0 : i32
        %14 = tpu.memref_slice %arg4[%5, %c0_i32_12] : memref<8x32xf32, #tpu.memory_space<vmem>> -> memref<1x32xf32, #tpu.memory_space<vmem>>
        %15 = tpu.memref_slice %arg5[%c0_i32] : memref<1x!tpu.dma_semaphore, #tpu.memory_space<semaphore_mem>> -> memref<1x!tpu.dma_semaphore, #tpu.memory_space<semaphore_mem>>
        %16 = tpu.memref_squeeze %15 : memref<1x!tpu.dma_semaphore, #tpu.memory_space<semaphore_mem>> -> memref<!tpu.dma_semaphore, #tpu.memory_space<semaphore_mem>>
        tpu.enqueue_dma source(%13 : memref<1x32xf32, #tpu.memory_space<any>>) target(%14 : memref<1x32xf32, #tpu.memory_space<vmem>>) target_semaphore(%16 : memref<!tpu.dma_semaphore, #tpu.memory_space<semaphore_mem>>)
      } else {
      }
    }
    %c8_i32_2 = arith.constant 8 : i32
    %c0_i32_3 = arith.constant 0 : i32
    %c0_i32_4 = arith.constant 0 : i32
    %c8_i32_5 = arith.constant 8 : i32
    %3 = arith.addi %c0_i32_4, %c8_i32_5 : i32
    %c1_i32_6 = arith.constant 1 : i32
    scf.for %arg6 = %c0_i32_4 to %3 step %c1_i32_6  : i32 {
      %c1_i32_8 = arith.constant 1 : i32
      %4 = arith.muli %arg6, %c1_i32_8 : i32
      %c0_i32_9 = arith.constant 0 : i32
      %5 = arith.addi %c0_i32_9, %4 : i32
      %6 = arith.addi %0, %5 : i32
      %7 = arith.cmpi slt, %6, %1 : i32
      %8 = arith.extui %7 : i1 to i32
      %c0_i32_10 = arith.constant 0 : i32
      %9 = arith.cmpi ne, %8, %c0_i32_10 : i32
      scf.if %9 {
        %c0_i32_11 = arith.constant 0 : i32
        %c0_i32_12 = arith.constant 0 : i32
        %10 = tpu.memref_slice %arg3[%c0_i32_11, %c0_i32_12] : memref<40x32xf32, #tpu.memory_space<any>> -> memref<1x32xf32, #tpu.memory_space<any>>
        %c0_i32_13 = arith.constant 0 : i32
        %c0_i32_14 = arith.constant 0 : i32
        %11 = tpu.memref_slice %arg4[%c0_i32_13, %c0_i32_14] : memref<8x32xf32, #tpu.memory_space<vmem>> -> memref<1x32xf32, #tpu.memory_space<vmem>>
        %12 = tpu.memref_slice %arg5[%c0_i32_3] : memref<1x!tpu.dma_semaphore, #tpu.memory_space<semaphore_mem>> -> memref<1x!tpu.dma_semaphore, #tpu.memory_space<semaphore_mem>>
        %13 = tpu.memref_squeeze %12 : memref<1x!tpu.dma_semaphore, #tpu.memory_space<semaphore_mem>> -> memref<!tpu.dma_semaphore, #tpu.memory_space<semaphore_mem>>
        tpu.wait_dma2 semaphore(%13 : memref<!tpu.dma_semaphore, #tpu.memory_space<semaphore_mem>>) src(%10 : memref<1x32xf32, #tpu.memory_space<any>>) dst(%11 : memref<1x32xf32, #tpu.memory_space<vmem>>)
      } else {
      }
    }
    %c8_i32_7 = arith.constant 8 : i32
    return
  }
  func.func @transform_1(%arg0: i32, %arg1: memref<1xi32, #tpu.memory_space<smem>>, %arg2: memref<16xi32, #tpu.memory_space<smem>>) -> (i32, i32) {
    %c0_i32 = arith.constant 0 : i32
    %c0_i32_0 = arith.constant 0 : i32
    return %arg0, %c0_i32 : i32, i32
  }
}

</mosaic_0001>

<llo_original>
// kernel: tpu_custom_call.1
$region0: #{tpu_custom_call.1}
  #allocation0 [shape = 'u32[]', space=smem, size = 0x4, offset = 0x4, fixed_abs, tag = 'smem constant byte address 0x4 - core index']
  #allocation1 [shape = 'u32[144,128]{1,0:T(1,128)}', space=vmem, size = 0x12000, scoped, tag = 'internal scratch']
  #allocation2 [shape = 's32[1]{0}', space=sflag, size = 0x4, scoped, tag = 'scratch operand']
  #allocation3 [shape = 's32[1]{0}', space=sflag, size = 0x4, scoped, tag = 'scoped memory for tpu_custom_call.1']
  #allocation4 [shape = 's32[1]{0:T(128)S(6)}', space=smem, size = 0x200, scoped, tag = 'prefetched SMEM operand 0']
  #allocation5 [shape = 'u8[512]{0}', space=smem, size = 0x200, scoped, tag = 'prefetched SMEM operand 1']
  #allocation8 [shape = 's32[]', space=sflag, size = 0x4, offset = 0, fixed_abs, tag = 'sflag constant byte address 0x0 - dummy sync flag']
  %s0 = inlined_call_operand.<no memory space> [shape: s32[1], index: 0, kind: input, shape index: {}]
  %s1 = inlined_call_operand.vmem [shape: s32[16], index: 1, kind: input, shape index: {}]
  %s2 = inlined_call_operand.vmem [shape: f32[40,32], index: 2, kind: input, shape index: {}]
  %s3 = inlined_call_operand.hbm [shape: f32[16,32], index: 3, kind: output, shape index: {}]
  %s4 = sld [smem:[#allocation0]]
  $region77: #{tpu_custom_call.1} parent=0
    _
  %s6 = ssub.s32 1, %s4
  %s7 = scalar_select 0, %s6, %s4
  %8 = sst [smem:[#allocation4]] %s0
  %s9 = sshll.u32 %s1, 4
  %s10 = int_to_ptr.vmem [resolvable:$true] %s9
  %12 = dma.vmem_to_smem %s10, 16, [#allocation5], [#allocation3]
  %13 = dma.done [#allocation3], 16
  %14 = sfence
  $region1: #{tpu_custom_call.1} parent=0
    #allocation6 [shape = 'u8[8192]{0}', space=vmem, size = 0x2000, scoped, tag = 'output window, operand 0']
    #allocation7 [shape = 's32[2]{0}', space=sflag, size = 0x8, scoped, tag = 'scoped memory for tpu_custom_call.1']
    %15 = vsyncpa [#allocation7], 0
    %s16 = scalar_lea.sflag [#allocation7], 1
    %17 = vsyncpa %s16, 0
    loop: start=0, step=1, limit=3
    $region2: #{tpu_custom_call.1} parent=1 // loop_pre_header
      _
    $region3: #{tpu_custom_call.1} parent=1 // loop_header
      %s19 = sphi 0, %s23
      %p20 = scmp.ge.s32.totalorder %s19, 3
      %s28 = sphi 0, %s30
      %s31 = sphi 0, %s28
      %s41 = sphi 0, %s31
    $region4: #{tpu_custom_call.1} parent=1 // loop_header_branch
      %22 = sbr.rel (%p20) target = $region8
    $region5: #{tpu_custom_call.1} parent=1 // loop_body
      %s24 = ssub.s32 %s19, 1
      %s25 = sadd.s32 %s19, 1
      %s26 = ssub.s32 %s19, %s25
      %p27 = scmp.eq.s32.totalorder %s26, 0
      %s29 = sadd.s32 %s28, 1
      %s30 = scalar_select %p27, %s28, %s29
      %p32 = pneg %p27
      %p33 = scmp.eq.s32.totalorder %s19, 1
      %p34 = por %p32, %p33
      %p35 = scmp.ne.s32.totalorder %s28, %s31
      %p36 = scmp.eq.s32.totalorder %s19, 0
      %p37 = por %p35, %p36
      %p38 = scmp.ne.s32.totalorder %s28, %s31
      %p39 = scmp.eq.s32.totalorder %s24, 1
      %p40 = por %p38, %p39
      %p42 = scmp.ne.s32.totalorder %s31, %s41
      %p43 = scmp.eq.s32.totalorder %s24, 0
      %p44 = por %p42, %p43
      %p45 = scmp.lt.s32.totalorder %s19, 2
      // Predicated region
      $region9: #{tpu_custom_call.1} parent=5 // pred_check
        %p46 = pneg %p45
      $region10: #{tpu_custom_call.1} parent=5 // pred_check_branch
        %48 = sbr.rel (%p46) target = $region12
      $region11: #{tpu_custom_call.1} parent=5 // pred_region
        %p49 = pneg %p37
        %p50 = pneg %p34
        %s51 = sand.u32 %s28, 1
        %s52 = scalar_lea.sflag [#allocation7], %s51
        %s53 = sand.u32 %s28, 1
        %s54 = smul.addr %s53, 8
        %s55 = scalar_lea.vmem [#allocation6], %s54
        %s56 = smul.u32 %s19, 8
        %s57 = sld [smem:[#allocation4]]
        loop: start=0, step=1, limit=8
        $region13: #{tpu_custom_call.1} parent=11 // loop_pre_header
          _
        $region14: #{tpu_custom_call.1} parent=11 // loop_header
          %s59 = sphi 0, %s63
          %p60 = scmp.ge.s32.totalorder %s59, 8
        $region15: #{tpu_custom_call.1} parent=11 // loop_header_branch
          %62 = sbr.rel (%p60) target = $region19
        $region16: #{tpu_custom_call.1} parent=11 // loop_body
          %s64 = sadd.s32 %s56, %s59
          %p65 = scmp.lt.s32.totalorder %s64, %s57
          // Predicated region
          $region20: #{tpu_custom_call.1} parent=16 // pred_check
            %p66 = pneg %p65
          $region21: #{tpu_custom_call.1} parent=16 // pred_check_branch
            %68 = sbr.rel (%p66) target = $region23
          $region22: #{tpu_custom_call.1} parent=16 // pred_region
            %s69 = sld [smem:[#allocation5 + %s64]]
            %s70 = scalar_lea.vmem %s2, %s69
            %s71 = scalar_lea.vmem %s55, %s59 [#allocation6]
            %p73 = scmp.lt.u32.totalorder 1, 8
            %p74 = pneg %p73
            // Predicated region
            $region24: #{tpu_custom_call.1} parent=22 // pred_check
              _
            $region25: #{tpu_custom_call.1} parent=22 // pred_check_branch
              %76 = sbr.rel (%p73) target = $region27
            $region26: #{tpu_custom_call.1} parent=22 // pred_region
              %s91 = sand.u32 1, 7
              %p92 = scmp.eq.s32.totalorder %s91, 0
              %p93 = pneg %p92
              // Predicated region
              $region39: #{tpu_custom_call.1} parent=26 // pred_check
                _
              $region40: #{tpu_custom_call.1} parent=26 // pred_check_branch
                %95 = sbr.rel (%p92) target = $region42
              $region41: #{tpu_custom_call.1} parent=26 // pred_region
                %s96 = sand.u32 1, 7
                %s97 = ssub.s32 1, %s96
                %s98 = scalar_lea.vmem %s70, %s97
                %s99 = ssub.s32 1, %s96
                %s100 = scalar_lea.vmem %s71, %s99 [#allocation6]
                %s101 = sshllo.u32 0, %s96
                loop: start=0, step=1, limit=1
                $region43: #{tpu_custom_call.1} parent=41 // loop_pre_header
                  _
                $region44: #{tpu_custom_call.1} parent=41 // loop_header
                  %s103 = sphi 0, %s107
                  %p104 = scmp.ge.s32.totalorder %s103, 1
                  %s108 = sphi %s98, %s98
                  %s109 = sphi %s100, %s100
                $region45: #{tpu_custom_call.1} parent=41 // loop_header_branch
                  %106 = sbr.rel (%p104) target = $region49
                $region46: #{tpu_custom_call.1} parent=41 // loop_body
                  %v110 = vld [vmem:[%s108] sm:%s101]
                  %111 = vst [vmem:[%s109] sm:%s101] %v110
                $region47: #{tpu_custom_call.1} parent=41 // loop_footer
                  %s107 = sadd.s32 1, %s103
                $region48: #{tpu_custom_call.1} parent=41 // loop_footer_branch
                  %102 = sbr.rel target = $region44
                $region49: #{tpu_custom_call.1} parent=41 // loop_exit
                  _
              $region42: #{tpu_custom_call.1} parent=26 // pred_fallthru
                _
            $region27: #{tpu_custom_call.1} parent=22 // pred_fallthru
              _
            // Predicated region
            $region28: #{tpu_custom_call.1} parent=22 // pred_check
              %p77 = pneg %p73
            $region29: #{tpu_custom_call.1} parent=22 // pred_check_branch
              %79 = sbr.rel (%p77) target = $region31
            $region30: #{tpu_custom_call.1} parent=22 // pred_region
              %s80 = sshllo.u32 0, 1
              loop: start=0, step=1, limit=1
              $region32: #{tpu_custom_call.1} parent=30 // loop_pre_header
                _
              $region33: #{tpu_custom_call.1} parent=30 // loop_header
                %s82 = sphi 0, %s86
                %p83 = scmp.ge.s32.totalorder %s82, 1
                %s87 = sphi %s70, %s70
                %s88 = sphi %s71, %s71
              $region34: #{tpu_custom_call.1} parent=30 // loop_header_branch
                %85 = sbr.rel (%p83) target = $region38
              $region35: #{tpu_custom_call.1} parent=30 // loop_body
                %v89 = vld [vmem:[%s87] sm:%s80]
                %90 = vst [vmem:[%s88] sm:%s80] %v89
              $region36: #{tpu_custom_call.1} parent=30 // loop_footer
                %s86 = sadd.s32 1, %s82
              $region37: #{tpu_custom_call.1} parent=30 // loop_footer_branch
                %81 = sbr.rel target = $region33
              $region38: #{tpu_custom_call.1} parent=30 // loop_exit
                _
            $region31: #{tpu_custom_call.1} parent=22 // pred_fallthru
              _
            // Predicated region
            $region50: #{tpu_custom_call.1} parent=22 // pred_check
              _
            $region51: #{tpu_custom_call.1} parent=22 // pred_check_branch
              %114 = sbr.rel (0) target = $region53
            $region52: #{tpu_custom_call.1} parent=22 // pred_region
              %115 = vsyncadd [#allocation2], 16
            $region53: #{tpu_custom_call.1} parent=22 // pred_fallthru
              _
          $region23: #{tpu_custom_call.1} parent=16 // pred_fallthru
            _
        $region17: #{tpu_custom_call.1} parent=11 // loop_footer
          %s63 = sadd.s32 1, %s59
        $region18: #{tpu_custom_call.1} parent=11 // loop_footer_branch
          %58 = sbr.rel target = $region14
        $region19: #{tpu_custom_call.1} parent=11 // loop_exit
          _
        loop: start=0, step=1, limit=8
        $region54: #{tpu_custom_call.1} parent=11 // loop_pre_header
          _
        $region55: #{tpu_custom_call.1} parent=11 // loop_header
          %s117 = sphi 0, %s121
          %p118 = scmp.ge.s32.totalorder %s117, 8
        $region56: #{tpu_custom_call.1} parent=11 // loop_header_branch
          %120 = sbr.rel (%p118) target = $region60
        $region57: #{tpu_custom_call.1} parent=11 // loop_body
          %s122 = sadd.s32 %s56, %s117
          %p123 = scmp.lt.s32.totalorder %s122, %s57
          // Predicated region
          $region61: #{tpu_custom_call.1} parent=57 // pred_check
            %p124 = pneg %p123
          $region62: #{tpu_custom_call.1} parent=57 // pred_check_branch
            %126 = sbr.rel (%p124) target = $region64
          $region63: #{tpu_custom_call.1} parent=57 // pred_region
            %s127 = smul.u32 1, 1
            %s128 = sshll.u32 %s127, 4
            %129 = dma.done [#allocation2], %s128
          $region64: #{tpu_custom_call.1} parent=57 // pred_fallthru
            _
        $region58: #{tpu_custom_call.1} parent=11 // loop_footer
          %s121 = sadd.s32 1, %s117
        $region59: #{tpu_custom_call.1} parent=11 // loop_footer_branch
          %116 = sbr.rel target = $region55
        $region60: #{tpu_custom_call.1} parent=11 // loop_exit
          _
        %s130 = sand.u32 %s28, 1
        %s131 = scalar_lea.sflag [#allocation7], %s130
        %s132 = sand.u32 %s28, 1
        %s133 = smul.addr %s132, 8
        %s134 = scalar_lea.vmem [#allocation6], %s133
        // Predicated region
        $region65: #{tpu_custom_call.1} parent=11 // pred_check
          %p135 = pneg %p34
        $region66: #{tpu_custom_call.1} parent=11 // pred_check_branch
          %137 = sbr.rel (%p135) target = $region68
        $region67: #{tpu_custom_call.1} parent=11 // pred_region
          %s139 = ssub.s32 128, 128
          %140 = vsyncadd %s131, %s139
          %s141 = smul.addr %s19, 128
          %s142 = scalar_lea.hbm %s3, %s141
          %s144 = sshll.u32 %s134, 4
          %s145 = int_to_ptr.vmem [resolvable:$true] %s144
          %147 = dma.vmem_to_hbm [thread:$0]  %s145, 128, %s142, %s131
        $region68: #{tpu_custom_call.1} parent=11 // pred_fallthru
          _
      $region12: #{tpu_custom_call.1} parent=5 // pred_fallthru
        _
      %p148 = scmp.le.s32.totalorder 1, %s19
      // Predicated region
      $region69: #{tpu_custom_call.1} parent=5 // pred_check
        %p149 = pneg %p148
      $region70: #{tpu_custom_call.1} parent=5 // pred_check_branch
        %151 = sbr.rel (%p149) target = $region72
      $region71: #{tpu_custom_call.1} parent=5 // pred_region
        %s152 = ssub.s32 %s19, 1
        // Predicated region
        $region73: #{tpu_custom_call.1} parent=71 // pred_check
          %p153 = pneg %p40
        $region74: #{tpu_custom_call.1} parent=71 // pred_check_branch
          %155 = sbr.rel (%p153) target = $region76
        $region75: #{tpu_custom_call.1} parent=71 // pred_region
          %s156 = sand.u32 %s31, 1
          %s157 = scalar_lea.sflag [#allocation7], %s156
          %s158 = sand.u32 %s31, 1
          %s159 = smul.addr %s158, 8
          %s160 = scalar_lea.vmem [#allocation6], %s159
          %161 = dma.done %s157, 128
        $region76: #{tpu_custom_call.1} parent=71 // pred_fallthru
          _
      $region72: #{tpu_custom_call.1} parent=5 // pred_fallthru
        _
    $region6: #{tpu_custom_call.1} parent=1 // loop_footer
      %s23 = sadd.s32 1, %s19
    $region7: #{tpu_custom_call.1} parent=1 // loop_footer_branch
      %18 = sbr.rel target = $region3
    $region8: #{tpu_custom_call.1} parent=1 // loop_exit
      _
    %162 = vsyncpa [#allocation7], 1
    %s163 = scalar_lea.sflag [#allocation7], 1
    %164 = vsyncpa %s163, 1
  %165 = vsyncmov [#allocation2]
  %s166 = vpop.sfrf %165
  %p167 = scmp.eq.s32.totalorder %s166, 0
  %p168 = pneg %p167
  %170 = shalt.err (%p168)

</llo_original>
